<compile_context>
chip_gen: v6e
topology: v6e:2x2x1
jax: 0.10.0
libtpu: 0.0.40
codegen_flags: <defaults>
</compile_context>

<pallas_src>
from typing import NamedTuple

import jax
import jax.numpy as jnp
import numpy as np
from jax.experimental import pallas as pl
from jax.experimental.pallas import tpu as pltpu


def _leaky_relu(x, slope=0.01):
    # max(x, slope*x) == leaky_relu(x) for 0 < slope < 1; 1 fewer VALU op than where().
    return jnp.maximum(x, slope * x)


def _round_up(x, m):
    return ((x + m - 1) // m) * m


class CriticParams(NamedTuple):
    """Pre-cast / pre-padded parameters (built once by prepare_critic_params)."""
    w1: jax.Array   # (S+A, H1) compute dtype; rows S..S+A-1 are zeros
    b1: jax.Array   # (1, H1)   f32
    w2s: jax.Array  # (H1, H2)  compute dtype
    w2a: jax.Array  # (S+A, H2) compute dtype; rows 0..S-1 are zeros
    b2: jax.Array   # (1, H2)   f32
    w3: jax.Array   # (1, H2)   compute dtype (fc3 weight row)
    b3: jax.Array   # (1, 1)    f32 (SMEM scalar)


def critic_kernel(x_ref,
                  w1_ref, b1_ref,
                  w2s_ref, w2a_ref, b2_ref,
                  w3_ref, b3_ref,
                  out_ref):
    x = x_ref[...]                                            # (TILE_B, S+A), compute dtype

    # --- fcs1: xs = leaky_relu(state @ W1 + b1)  (W1 zero-padded over action lanes)
    xs = jnp.dot(x, w1_ref[...], preferred_element_type=jnp.float32)   # MXU, f32 acc
    xs = _leaky_relu(xs + b1_ref[...])                        # VPU, f32
    # TODO(synk): training-mode dropout(0.2) not implemented (identity in eval mode).

    # --- fc2 on concat([xs, action], 1): xs @ W2s + action @ W2a + b2 ---------
    h = jnp.dot(xs.astype(w2s_ref.dtype), w2s_ref[...],
                preferred_element_type=jnp.float32)           # MXU, f32 acc
    h = h + jnp.dot(x, w2a_ref[...],
                    preferred_element_type=jnp.float32)       # MXU (W2a zero-padded over state lanes)
    h = _leaky_relu(h + b2_ref[...])
    # dropout(0.2) -> identity in eval mode.

    # --- fc3: q = h @ w3^T + b3, emitted lane-dense as a (1, TILE_B) row ------
    q = jax.lax.dot_general(
        w3_ref[...], h.astype(w3_ref.dtype),
        dimension_numbers=(((1,), (1,)), ((), ())),           # contract H2 with H2
        preferred_element_type=jnp.float32)                   # (1, TILE_B)
    out_ref[...] = q + b3_ref[0, 0]                           # scalar bias from SMEM


def prepare_critic_params(params, compute_dtype=jnp.bfloat16):
    """One-time cast / pad / reshape of raw params (hoisted out of the forward)."""
    w1, b1, w2s, w2a, b2, w3, b3 = params
    S, H1 = w1.shape
    A, H2 = w2a.shape
    w1_p = jnp.concatenate(
        [w1, jnp.zeros((A, H1), w1.dtype)], axis=0).astype(compute_dtype)       # (S+A, H1)
    w2a_p = jnp.concatenate(
        [jnp.zeros((S, H2), w2a.dtype), w2a], axis=0).astype(compute_dtype)     # (S+A, H2)
    return CriticParams(
        w1=w1_p,
        b1=b1.astype(jnp.float32).reshape(1, H1),
        w2s=w2s.astype(compute_dtype),
        w2a=w2a_p,
        b2=b2.astype(jnp.float32).reshape(1, H2),
        w3=w3.astype(compute_dtype).reshape(1, H2),
        b3=b3.astype(jnp.float32).reshape(1, 1),
    )


def critic_forward(state, action, p: CriticParams, *, force_pallas=False):
    """Critic forward pass. Returns (B, 1) f32 Q-values."""
    B = state.shape[0]
    compute_dtype = p.w1.dtype
    x = jnp.concatenate([state, action], axis=1).astype(compute_dtype)   # (B, S+A)
    SA = x.shape[1]
    H1 = p.w1.shape[1]
    H2 = p.w2s.shape[1]

    # Tiny-batch fallback: pallas_call fixed dispatch/DMA cost dominates; let XLA fuse.
    if B <= 128 and not force_pallas:
        xs = _leaky_relu(jnp.dot(x, p.w1, preferred_element_type=jnp.float32) + p.b1)
        h = (jnp.dot(xs.astype(compute_dtype), p.w2s, preferred_element_type=jnp.float32)
             + jnp.dot(x, p.w2a, preferred_element_type=jnp.float32) + p.b2)
        h = _leaky_relu(h)
        q = jnp.dot(h.astype(compute_dtype), p.w3.T,
                    preferred_element_type=jnp.float32) + p.b3
        return q

    # --- batch tiling ---------------------------------------------------------
    align = 16 if np.dtype(compute_dtype).itemsize == 2 else 8   # bf16 sublane pack
    MAX_TILE = 1024                                              # safe on v5e/v6e/v7x
    if B <= MAX_TILE:
        tile_b = max(align, _round_up(B, align))   # single grid step
        b_pad = tile_b
    else:
        tile_b = MAX_TILE                          # multiple of 128 -> lane-dense out block legal
        b_pad = _round_up(B, tile_b)               # >=2 tiles feeds both v7x TensorCores
    num_tiles = b_pad // tile_b

    if b_pad != B:
        x = jnp.pad(x, ((0, b_pad - B), (0, 0)))

    operands = (x, p.w1, p.b1, p.w2s, p.w2a, p.b2, p.w3, p.b3)

    flops = 2 * b_pad * (SA * H1 + H1 * H2 + SA * H2 + H2)
    bytes_accessed = int(sum(int(o.size) * o.dtype.itemsize for o in operands) + 4 * b_pad)
    cost = pl.CostEstimate(flops=flops, transcendentals=0, bytes_accessed=bytes_accessed)

    row_spec = lambda i: (i, 0)     # batch-tiled input stream
    const_spec = lambda i: (0, 0)   # weights/biases: same block every step -> VMEM-resident

    in_specs = [
        pl.BlockSpec((tile_b, SA), row_spec),                 # fused [state | action]
        pl.BlockSpec((SA, H1), const_spec),                   # W1 (padded)
        pl.BlockSpec((1, H1), const_spec),                    # b1
        pl.BlockSpec((H1, H2), const_spec),                   # W2s
        pl.BlockSpec((SA, H2), const_spec),                   # W2a (padded)
        pl.BlockSpec((1, H2), const_spec),                    # b2
        pl.BlockSpec((1, H2), const_spec),                    # w3 row
        pl.BlockSpec(memory_space=pltpu.MemorySpace.SMEM),    # b3 scalar
    ]
    # Lane-dense output: one (1, TILE_B) row per grid step -> unmasked vector stores.
    out_specs = pl.BlockSpec((1, tile_b), lambda i: (0, i))
    out_shape = jax.ShapeDtypeStruct((1, b_pad), jnp.float32)

    q_row = pl.pallas_call(
        critic_kernel,
        grid=(num_tiles,),
        in_specs=in_specs,
        out_specs=out_specs,
        out_shape=out_shape,
        compiler_params=pltpu.CompilerParams(
            dimension_semantics=("parallel",)),
        cost_estimate=cost,
    )(*operands)

    return q_row.reshape(b_pad, 1)[:B]


def init_critic_params(key, state_size, action_size,
                       fcs1_units=256, fc2_units=128):
    """Deterministic init mirroring the PyTorch module's reset_parameters().

    hidden_init uses weight.size()[0] == out_features as 'fan_in' (that is what
    the reference code computes), so the limits follow that.  Weights are stored
    as (in_features, out_features) so the kernel does x @ W + b; fc2's weight is
    pre-split into [xs | action] halves; fc3's weight is a (1, fc2_units) row.
    """
    k1, k2, k3, kb1, kb2, kb3 = jax.random.split(key, 6)

    lim1 = 1.0 / np.sqrt(fcs1_units)     # fcs1: weight.size()[0] = 256
    lim2 = 1.0 / np.sqrt(fc2_units)      # fc2 : weight.size()[0] = 128
    lim3 = 0.003

    w1 = jax.random.uniform(k1, (state_size, fcs1_units),
                            minval=-lim1, maxval=lim1, dtype=jnp.float32)
    w2 = jax.random.uniform(k2, (fcs1_units + action_size, fc2_units),
                            minval=-lim2, maxval=lim2, dtype=jnp.float32)
    w3 = jax.random.uniform(k3, (1, fc2_units),
                            minval=-lim3, maxval=lim3, dtype=jnp.float32)

    # Biases: PyTorch nn.Linear default uniform(-1/sqrt(in_features), +...)
    b1 = jax.random.uniform(kb1, (1, fcs1_units),
                            minval=-1.0 / np.sqrt(state_size),
                            maxval=1.0 / np.sqrt(state_size), dtype=jnp.float32)
    b2 = jax.random.uniform(kb2, (1, fc2_units),
                            minval=-1.0 / np.sqrt(fcs1_units + action_size),
                            maxval=1.0 / np.sqrt(fcs1_units + action_size),
                            dtype=jnp.float32)
    b3 = jax.random.uniform(kb3, (1, 1),
                            minval=-1.0 / np.sqrt(fc2_units),
                            maxval=1.0 / np.sqrt(fc2_units), dtype=jnp.float32)

    w2s, w2a = w2[:fcs1_units, :], w2[fcs1_units:, :]
    return (w1, b1, w2s, w2a, b2, w3, b3)


def critic_reference(state, action, params):
    """Pure-JAX f32 reference mirroring the PyTorch forward (eval mode)."""
    w1, b1, w2s, w2a, b2, w3, b3 = params
    xs = jnp.where(state @ w1 + b1 > 0, state @ w1 + b1, 0.01 * (state @ w1 + b1))
    x = jnp.concatenate([xs, action], axis=1)
    w2 = jnp.concatenate([w2s, w2a], axis=0)
    pre2 = x @ w2 + b2
    h = jnp.where(pre2 > 0, pre2, 0.01 * pre2)
    return h @ w3.T + b3


if __name__ == "__main__":
    # 2-agent MADDPG critic: concatenated states (2*24=48), concatenated actions (2*2=4).
    STATE_SIZE, ACTION_SIZE = 48, 4

    key = jax.random.PRNGKey(0)
    k_s1, k_a1, k_s2, k_a2, k_p = jax.random.split(key, 5)
    raw_params = init_critic_params(k_p, STATE_SIZE, ACTION_SIZE)

    params_f32 = prepare_critic_params(raw_params, compute_dtype=jnp.float32)
    params_bf16 = prepare_critic_params(raw_params, compute_dtype=jnp.bfloat16)

    # --- case 1: small batch, f32 compute, kernel forced (strict parity) -----
    B1 = 8
    s1 = jax.random.normal(k_s1, (B1, STATE_SIZE), dtype=jnp.float32)
    a1 = jax.random.uniform(k_a1, (B1, ACTION_SIZE),
                            minval=-1.0, maxval=1.0, dtype=jnp.float32)
    q1 = jax.block_until_ready(critic_forward(s1, a1, params_f32, force_pallas=True))
    ref1 = critic_reference(s1, a1, raw_params)
    assert q1.shape == (B1, 1)
    np.testing.assert_allclose(np.asarray(q1), np.asarray(ref1), rtol=1e-4, atol=1e-4)

    # small-batch XLA fallback path (review: skip Pallas for B <= 128 by default)
    q1_fb = jax.block_until_ready(critic_forward(s1, a1, params_f32))
    np.testing.assert_allclose(np.asarray(q1_fb), np.asarray(ref1), rtol=1e-4, atol=1e-4)

    # --- case 2: larger batch, bf16 MXU path (single padded tile) ------------
    B2 = 300
    s2 = jax.random.normal(k_s2, (B2, STATE_SIZE), dtype=jnp.float32)
    a2 = jax.random.uniform(k_a2, (B2, ACTION_SIZE),
                            minval=-1.0, maxval=1.0, dtype=jnp.float32)
    q2 = jax.block_until_ready(critic_forward(s2, a2, params_bf16))
    ref2 = critic_reference(s2, a2, raw_params)
    assert q2.shape == (B2, 1)
    np.testing.assert_allclose(np.asarray(q2), np.asarray(ref2), rtol=3e-2, atol=3e-2)

    print("KERNEL_OK")
</pallas_src>

<mosaic_0001>
module attributes {stable_mosaic.version = 11 : i64} {
  func.func @critic_kernel(%arg0: i32, %arg1: memref<8x52xf32, #tpu.memory_space<vmem>>, %arg2: memref<52x256xf32, #tpu.memory_space<vmem>>, %arg3: memref<1x256xf32, #tpu.memory_space<vmem>>, %arg4: memref<256x128xf32, #tpu.memory_space<vmem>>, %arg5: memref<52x128xf32, #tpu.memory_space<vmem>>, %arg6: memref<1x128xf32, #tpu.memory_space<vmem>>, %arg7: memref<1x128xf32, #tpu.memory_space<vmem>>, %arg8: memref<1x1xf32, #tpu.memory_space<smem>>, %arg9: memref<1x8xf32, #tpu.memory_space<vmem>>) attributes {dimension_semantics = [#tpu.dimension_semantics<parallel>], iteration_bounds = array<i64: 1>, scalar_prefetch = 0 : i64, scratch_operands = 0 : i64, tpu.core_type = #tpu.core_type<tc>, window_params = [{transform_indices = @transform_0, window_bounds = array<i64: 8, 52>}, {pipeline_mode = #tpu.pipeline_mode<synchronous>, transform_indices = @transform_1, window_bounds = array<i64: 52, 256>}, {pipeline_mode = #tpu.pipeline_mode<synchronous>, transform_indices = @transform_2, window_bounds = array<i64: 1, 256>}, {pipeline_mode = #tpu.pipeline_mode<synchronous>, transform_indices = @transform_3, window_bounds = array<i64: 256, 128>}, {pipeline_mode = #tpu.pipeline_mode<synchronous>, transform_indices = @transform_4, window_bounds = array<i64: 52, 128>}, {pipeline_mode = #tpu.pipeline_mode<synchronous>, transform_indices = @transform_5, window_bounds = array<i64: 1, 128>}, {pipeline_mode = #tpu.pipeline_mode<synchronous>, transform_indices = @transform_6, window_bounds = array<i64: 1, 128>}, {transform_indices = @transform_7, window_bounds = array<i64: 1, 1>}, {transform_indices = @transform_8, window_bounds = array<i64: 1, 8>}]} {
    %c0 = arith.constant 0 : index
    %c0_0 = arith.constant 0 : index
    %0 = vector.load %arg1[%c0, %c0_0] : memref<8x52xf32, #tpu.memory_space<vmem>>, vector<8x52xf32>
    %c0_1 = arith.constant 0 : index
    %c0_2 = arith.constant 0 : index
    %1 = vector.load %arg2[%c0_1, %c0_2] : memref<52x256xf32, #tpu.memory_space<vmem>>, vector<52x256xf32>
    %cst = arith.constant dense<0.000000e+00> : vector<8x256xf32>
    %2 = tpu.matmul %0, %1, %cst {dimension_numbers = #tpu.dot_dimension_numbers<[1], [0], [0], [1], [0, 0, 1, 1], [], []>} : vector<8x52xf32>, vector<52x256xf32>, vector<8x256xf32> -> vector<8x256xf32>
    %c0_3 = arith.constant 0 : index
    %c0_4 = arith.constant 0 : index
    %3 = vector.load %arg3[%c0_3, %c0_4] : memref<1x256xf32, #tpu.memory_space<vmem>>, vector<1x256xf32>
    %4 = vector.broadcast %3 : vector<1x256xf32> to vector<8x256xf32>
    %5 = arith.addf %2, %4 : vector<8x256xf32>
    %cst_5 = arith.constant 0.00999999977 : f32
    %6 = vector.broadcast %cst_5 : f32 to vector<8x256xf32>
    %7 = arith.mulf %6, %5 : vector<8x256xf32>
    %8 = arith.maximumf %5, %7 : vector<8x256xf32>
    %c0_6 = arith.constant 0 : index
    %c0_7 = arith.constant 0 : index
    %9 = vector.load %arg4[%c0_6, %c0_7] : memref<256x128xf32, #tpu.memory_space<vmem>>, vector<256x128xf32>
    %cst_8 = arith.constant dense<0.000000e+00> : vector<8x128xf32>
    %10 = tpu.matmul %8, %9, %cst_8 {dimension_numbers = #tpu.dot_dimension_numbers<[1], [0], [0], [1], [0, 0, 1, 1], [], []>} : vector<8x256xf32>, vector<256x128xf32>, vector<8x128xf32> -> vector<8x128xf32>
    %c0_9 = arith.constant 0 : index
    %c0_10 = arith.constant 0 : index
    %11 = vector.load %arg5[%c0_9, %c0_10] : memref<52x128xf32, #tpu.memory_space<vmem>>, vector<52x128xf32>
    %cst_11 = arith.constant dense<0.000000e+00> : vector<8x128xf32>
    %12 = tpu.matmul %0, %11, %cst_11 {dimension_numbers = #tpu.dot_dimension_numbers<[1], [0], [0], [1], [0, 0, 1, 1], [], []>} : vector<8x52xf32>, vector<52x128xf32>, vector<8x128xf32> -> vector<8x128xf32>
    %13 = arith.addf %10, %12 : vector<8x128xf32>
    %c0_12 = arith.constant 0 : index
    %c0_13 = arith.constant 0 : index
    %14 = vector.load %arg6[%c0_12, %c0_13] : memref<1x128xf32, #tpu.memory_space<vmem>>, vector<1x128xf32>
    %15 = vector.broadcast %14 : vector<1x128xf32> to vector<8x128xf32>
    %16 = arith.addf %13, %15 : vector<8x128xf32>
    %cst_14 = arith.constant 0.00999999977 : f32
    %17 = vector.broadcast %cst_14 : f32 to vector<8x128xf32>
    %18 = arith.mulf %17, %16 : vector<8x128xf32>
    %19 = arith.maximumf %16, %18 : vector<8x128xf32>
    %c0_15 = arith.constant 0 : index
    %c0_16 = arith.constant 0 : index
    %20 = vector.load %arg7[%c0_15, %c0_16] : memref<1x128xf32, #tpu.memory_space<vmem>>, vector<1x128xf32>
    %cst_17 = arith.constant dense<0.000000e+00> : vector<1x8xf32>
    %21 = tpu.matmul %20, %19, %cst_17 {dimension_numbers = #tpu.dot_dimension_numbers<[1], [1], [0], [0], [0, 0, 1, 0], [], []>} : vector<1x128xf32>, vector<8x128xf32>, vector<1x8xf32> -> vector<1x8xf32>
    %c0_18 = arith.constant 0 : index
    %c0_19 = arith.constant 0 : index
    %22 = memref.load %arg8[%c0_18, %c0_19] : memref<1x1xf32, #tpu.memory_space<smem>>
    %23 = vector.broadcast %22 : f32 to vector<1x8xf32>
    %24 = arith.addf %21, %23 : vector<1x8xf32>
    %c0_20 = arith.constant 0 : index
    %c0_21 = arith.constant 0 : index
    %25 = vector.load %arg9[%c0_20, %c0_21] : memref<1x8xf32, #tpu.memory_space<vmem>>, vector<1x8xf32>
    tpu.vector_store %arg9[%c0_20, %c0_21], %24 {strides = array<i32>} : memref<1x8xf32, #tpu.memory_space<vmem>>, vector<1x8xf32>,
    return
  }
  func.func @transform_0(%arg0: i32) -> (i32, i32) {
    %c0_i32 = arith.constant 0 : i32
    %c0_i32_0 = arith.constant 0 : i32
    return %arg0, %c0_i32 : i32, i32
  }
  func.func @transform_1(%arg0: i32) -> (i32, i32) {
    %c0_i32 = arith.constant 0 : i32
    %c0_i32_0 = arith.constant 0 : i32
    %c0_i32_1 = arith.constant 0 : i32
    return %c0_i32, %c0_i32_0 : i32, i32
  }
  func.func @transform_2(%arg0: i32) -> (i32, i32) {
    %c0_i32 = arith.constant 0 : i32
    %c0_i32_0 = arith.constant 0 : i32
    %c0_i32_1 = arith.constant 0 : i32
    return %c0_i32, %c0_i32_0 : i32, i32
  }
  func.func @transform_3(%arg0: i32) -> (i32, i32) {
    %c0_i32 = arith.constant 0 : i32
    %c0_i32_0 = arith.constant 0 : i32
    %c0_i32_1 = arith.constant 0 : i32
    return %c0_i32, %c0_i32_0 : i32, i32
  }
  func.func @transform_4(%arg0: i32) -> (i32, i32) {
    %c0_i32 = arith.constant 0 : i32
    %c0_i32_0 = arith.constant 0 : i32
    %c0_i32_1 = arith.constant 0 : i32
    return %c0_i32, %c0_i32_0 : i32, i32
  }
  func.func @transform_5(%arg0: i32) -> (i32, i32) {
    %c0_i32 = arith.constant 0 : i32
    %c0_i32_0 = arith.constant 0 : i32
    %c0_i32_1 = arith.constant 0 : i32
    return %c0_i32, %c0_i32_0 : i32, i32
  }
  func.func @transform_6(%arg0: i32) -> (i32, i32) {
    %c0_i32 = arith.constant 0 : i32
    %c0_i32_0 = arith.constant 0 : i32
    %c0_i32_1 = arith.constant 0 : i32
    return %c0_i32, %c0_i32_0 : i32, i32
  }
  func.func @transform_7(%arg0: i32) -> (i32, i32) {
    %c0_i32 = arith.constant 0 : i32
    %c0_i32_0 = arith.constant 0 : i32
    %c0_i32_1 = arith.constant 0 : i32
    return %c0_i32, %c0_i32_0 : i32, i32
  }
  func.func @transform_8(%arg0: i32) -> (i32, i32) {
    %c0_i32 = arith.constant 0 : i32
    %c0_i32_0 = arith.constant 0 : i32
    return %c0_i32, %arg0 : i32, i32
  }
}

</mosaic_0001>

<llo_original>
// kernel: tpu_custom_call.1
$region0: #{tpu_custom_call.1}
  #allocation0 [shape = 'u32[]', space=smem, size = 0x4, offset = 0x4, fixed_abs, tag = 'smem constant byte address 0x4 - core index']
  #allocation1 [shape = 'u32[144,128]{1,0:T(1,128)}', space=vmem, size = 0x12000, scoped, tag = 'internal scratch']
  #allocation2 [shape = 'f32[1,1]{1,0:T(1,128)S(6)}', space=smem, size = 0x200, scoped, tag = 'scoped memory for tpu_custom_call.1']
  %s0 = inlined_call_operand.hbm [shape: f32[8,52], index: 0, kind: input, shape index: {}]
  %s1 = inlined_call_operand.hbm [shape: f32[52,256], index: 1, kind: input, shape index: {}]
  %s2 = inlined_call_operand.vmem [shape: f32[1,256], index: 2, kind: input, shape index: {}]
  %s3 = inlined_call_operand.hbm [shape: f32[256,128], index: 3, kind: input, shape index: {}]
  %s4 = inlined_call_operand.hbm [shape: f32[52,128], index: 4, kind: input, shape index: {}]
  %s5 = inlined_call_operand.vmem [shape: f32[1,128], index: 5, kind: input, shape index: {}]
  %s6 = inlined_call_operand.vmem [shape: f32[1,128], index: 6, kind: input, shape index: {}]
  %s7 = inlined_call_operand.<no memory space> [shape: f32[1,1], index: 7, kind: input, shape index: {}]
  %s8 = inlined_call_operand.hbm [shape: f32[1,8], index: 8, kind: output, shape index: {}]
  %s9 = sld [smem:[#allocation0]]
  $region58: #{tpu_custom_call.1} parent=0
    _
  %s11 = ssub.s32 1, %s9
  %s12 = scalar_select 0, %s11, %s9
  %13 = sst [smem:[#allocation2]] %s7
  $region1: #{tpu_custom_call.1} parent=0
    #allocation3 [shape = 'u8[4096]{0}', space=vmem, size = 0x1000, scoped, tag = 'input window, operand 0, single buffered']
    #allocation4 [shape = 's32[1]{0}', space=sflag, size = 0x4, scoped, tag = 'scoped memory for tpu_custom_call.1']
    #allocation5 [shape = 's32[1]{0}', space=sflag, size = 0x4, scoped, tag = 'scoped memory for tpu_custom_call.1']
    #allocation6 [shape = 'u8[57344]{0}', space=vmem, size = 0xe000, scoped, tag = 'input window, operand 1, single buffered']
    #allocation7 [shape = 's32[1]{0}', space=sflag, size = 0x4, scoped, tag = 'scoped memory for tpu_custom_call.1']
    #allocation8 [shape = 'u8[131072]{0}', space=vmem, size = 0x20000, scoped, tag = 'input window, operand 3, single buffered']
    #allocation9 [shape = 'u8[28672]{0}', space=vmem, size = 0x7000, scoped, tag = 'input window, operand 4, single buffered']
    #allocation10 [shape = 's32[1]{0}', space=sflag, size = 0x4, scoped, tag = 'scoped memory for tpu_custom_call.1']
    #allocation11 [shape = 'u8[512]{0}', space=vmem, size = 0x400, scoped, tag = 'output window, operand 0, single buffered']
    %14 = vsyncpa [#allocation4], 0
    %15 = vsyncpa [#allocation7], 0
    %16 = vsyncpa [#allocation10], 0
    %17 = vsyncpa [#allocation5], 0
    // Predicated region
    $region2: #{tpu_custom_call.1} parent=1 // pred_check
      _
    $region3: #{tpu_custom_call.1} parent=1 // pred_check_branch
      %19 = sbr.rel (0) target = $region5
    $region4: #{tpu_custom_call.1} parent=1 // pred_region
      %s21 = ssub.s32 128, 128
      %22 = vsyncadd [#allocation4], %s21
      %s24 = sshll.u32 [#allocation3], 4
      %s25 = int_to_ptr.vmem [resolvable:$true] %s24
      %27 = dma.hbm_to_vmem [thread:$0]  %s0, 128, %s25, [#allocation4]
    $region5: #{tpu_custom_call.1} parent=1 // pred_fallthru
      _
    // Predicated region
    $region6: #{tpu_custom_call.1} parent=1 // pred_check
      _
    $region7: #{tpu_custom_call.1} parent=1 // pred_check_branch
      %29 = sbr.rel (0) target = $region9
    $region8: #{tpu_custom_call.1} parent=1 // pred_region
      %s31 = ssub.s32 1792, 1792
      %32 = vsyncadd [#allocation7], %s31
      %s33 = sshll.u32 [#allocation6], 4
      %s34 = int_to_ptr.vmem [resolvable:$true] %s33
      %39 = dma.hbm_to_vmem [thread:$0]  %s1, 1792, %s34, [#allocation7], 256, 256, 16
    $region9: #{tpu_custom_call.1} parent=1 // pred_fallthru
      _
    // Predicated region
    $region10: #{tpu_custom_call.1} parent=1 // pred_check
      _
    $region11: #{tpu_custom_call.1} parent=1 // pred_check_branch
      %41 = sbr.rel (0) target = $region13
    $region12: #{tpu_custom_call.1} parent=1 // pred_region
      _
    $region13: #{tpu_custom_call.1} parent=1 // pred_fallthru
      _
    // Predicated region
    $region14: #{tpu_custom_call.1} parent=1 // pred_check
      _
    $region15: #{tpu_custom_call.1} parent=1 // pred_check_branch
      %43 = sbr.rel (0) target = $region17
    $region16: #{tpu_custom_call.1} parent=1 // pred_region
      %s45 = ssub.s32 4096, 4096
      %46 = vsyncadd [#allocation7], %s45
      %s47 = sshll.u32 [#allocation8], 4
      %s48 = int_to_ptr.vmem [resolvable:$true] %s47
      %53 = dma.hbm_to_vmem [thread:$0]  %s3, 4096, %s48, [#allocation7], 128, 128, 8
    $region17: #{tpu_custom_call.1} parent=1 // pred_fallthru
      _
    // Predicated region
    $region18: #{tpu_custom_call.1} parent=1 // pred_check
      _
    $region19: #{tpu_custom_call.1} parent=1 // pred_check_branch
      %55 = sbr.rel (0) target = $region21
    $region20: #{tpu_custom_call.1} parent=1 // pred_region
      %s57 = ssub.s32 896, 896
      %58 = vsyncadd [#allocation10], %s57
      %s59 = sshll.u32 [#allocation9], 4
      %s60 = int_to_ptr.vmem [resolvable:$true] %s59
      %65 = dma.hbm_to_vmem [thread:$0]  %s4, 896, %s60, [#allocation10], 128, 128, 8
    $region21: #{tpu_custom_call.1} parent=1 // pred_fallthru
      _
    // Predicated region
    $region22: #{tpu_custom_call.1} parent=1 // pred_check
      _
    $region23: #{tpu_custom_call.1} parent=1 // pred_check_branch
      %67 = sbr.rel (0) target = $region25
    $region24: #{tpu_custom_call.1} parent=1 // pred_region
      _
    $region25: #{tpu_custom_call.1} parent=1 // pred_fallthru
      _
    // Predicated region
    $region26: #{tpu_custom_call.1} parent=1 // pred_check
      _
    $region27: #{tpu_custom_call.1} parent=1 // pred_check_branch
      %69 = sbr.rel (0) target = $region29
    $region28: #{tpu_custom_call.1} parent=1 // pred_region
      _
    $region29: #{tpu_custom_call.1} parent=1 // pred_fallthru
      _
    // Predicated region
    $region30: #{tpu_custom_call.1} parent=1 // pred_check
      _
    $region31: #{tpu_custom_call.1} parent=1 // pred_check_branch
      %71 = sbr.rel (0) target = $region33
    $region32: #{tpu_custom_call.1} parent=1 // pred_region
      _
    $region33: #{tpu_custom_call.1} parent=1 // pred_fallthru
      _
    // Predicated region
    $region34: #{tpu_custom_call.1} parent=1 // pred_check
      _
    $region35: #{tpu_custom_call.1} parent=1 // pred_check_branch
      %73 = sbr.rel (0) target = $region37
    $region36: #{tpu_custom_call.1} parent=1 // pred_region
      %74 = dma.done [#allocation4], 128
    $region37: #{tpu_custom_call.1} parent=1 // pred_fallthru
      _
    // Predicated region
    $region38: #{tpu_custom_call.1} parent=1 // pred_check
      _
    $region39: #{tpu_custom_call.1} parent=1 // pred_check_branch
      %76 = sbr.rel (0) target = $region41
    $region40: #{tpu_custom_call.1} parent=1 // pred_region
      %77 = dma.done [#allocation7], 1792
    $region41: #{tpu_custom_call.1} parent=1 // pred_fallthru
      _
    // Predicated region
    $region42: #{tpu_custom_call.1} parent=1 // pred_check
      _
    $region43: #{tpu_custom_call.1} parent=1 // pred_check_branch
      %79 = sbr.rel (0) target = $region45
    $region44: #{tpu_custom_call.1} parent=1 // pred_region
      %80 = dma.done [#allocation7], 4096
    $region45: #{tpu_custom_call.1} parent=1 // pred_fallthru
      _
    // Predicated region
    $region46: #{tpu_custom_call.1} parent=1 // pred_check
      _
    $region47: #{tpu_custom_call.1} parent=1 // pred_check_branch
      %82 = sbr.rel (0) target = $region49
    $region48: #{tpu_custom_call.1} parent=1 // pred_region
      %83 = dma.done [#allocation10], 896
    $region49: #{tpu_custom_call.1} parent=1 // pred_fallthru
      _
    %v84 = vld [vmem:[#allocation3] sm:$0xff]
    %v85 = vld [vmem:[#allocation6] sm:$0xff]
    %v86 = vld [vmem:[#allocation6 + $0x8] sm:$0xff]
    %v87 = vld [vmem:[#allocation6 + $0x10] sm:$0xff]
    %v88 = vld [vmem:[#allocation6 + $0x18] sm:$0xff]
    %v89 = vld [vmem:[#allocation6 + $0x20] sm:$0xff]
    %v90 = vld [vmem:[#allocation6 + $0x28] sm:$0xff]
    %v91 = vld [vmem:[#allocation6 + $0x30] sm:$0xff]
    %v92 = vld [vmem:[#allocation6 + $0x38] sm:$0xff]
    %v93 = vld [vmem:[#allocation6 + $0x40] sm:$0xff]
    %v94 = vld [vmem:[#allocation6 + $0x48] sm:$0xff]
    %v95 = vld [vmem:[#allocation6 + $0x50] sm:$0xff]
    %v96 = vld [vmem:[#allocation6 + $0x58] sm:$0xff]
    %v97 = vld [vmem:[#allocation6 + $0x60] sm:$0xf]
    %v98 = vld [vmem:[#allocation6 + $0x68] sm:$0xf]
    %v99 = vld [vmem:[%s2] sm:$0x3]
    %v101 = vlaneseq
    %v102 = vshrl.u32 %v101, 7
    %v103 = vsub.s32 0, %v102
    %v104 = vrot.slane %v99, %v103
    %v105 = vlaneseq
    %v106 = vshrl.u32 %v105, 7
    %v107 = vsub.s32 1, %v106
    %v108 = vrot.slane %v99, %v107
    %vm111 = vcmask 424960
    %v113 = vsel %vm111, %v84, 0
    %vm115 = vcmask 1043456
    %v117 = vsel %vm115, %v97, 0
    %v120 = vsel %vm115, %v98, 0
    %122 = vmatprep.subr.mxu0 0.0
    %123 = vmatpush1.msra.mxu0 0.0
    %124 = vmatprep.subr.mxu0 0.0
    %125 = vmatpush1.msra.mxu0 0.0
    %126 = vmatprep.subr.mxu0 0.0
    %127 = vmatpush1.msra.mxu0 0.0
    %128 = vmatprep.subr.mxu0 0.0
    %129 = vmatpush1.msra.mxu0 0.0
    %130 = vmatprep.subr.mxu0 0.0
    %131 = vmatpush1.msra.mxu0 0.0
    %132 = vmatprep.subr.mxu0 0.0
    %133 = vmatpush1.msra.mxu0 0.0
    %134 = vmatprep.subr.mxu0 0.0
    %135 = vmatpush1.msra.mxu0 0.0
    %136 = vmatprep.subr.mxu0 0.0
    %137 = vmatpush1.msra.mxu0 0.0
    %138 = vmatprep.subr.mxu0 0.0
    %139 = vmatpush1.msra.mxu0 0.0
    %140 = vmatprep.subr.mxu0 %v120
    %141 = vmatpush1.msra.mxu0 %v117
    %142 = vmatprep.subr.mxu0 %v96
    %143 = vmatpush1.msra.mxu0 %v95
    %144 = vmatprep.subr.mxu0 %v94
    %145 = vmatpush1.msra.mxu0 %v93
    %146 = vmatprep.subr.mxu0 %v92
    %147 = vmatpush1.msra.mxu0 %v91
    %148 = vmatprep.subr.mxu0 %v90
    %149 = vmatpush1.msra.mxu0 %v89
    %150 = vmatprep.subr.mxu0 %v88
    %151 = vmatpush1.msra.mxu0 %v87
    %152 = vmatprep.subr.mxu0 %v86
    %153 = vmatpush1.msra.mxu0 %v85
    %154 = vmatprep.subr.mxu0 0.0
    %155 = vmatpush2.msra.mxu0 0.0
    %156 = vmatprep.subr.mxu0 0.0
    %157 = vmatpush2.msra.mxu0 0.0
    %158 = vmatprep.subr.mxu0 0.0
    %159 = vmatpush2.msra.mxu0 0.0
    %160 = vmatprep.subr.mxu0 0.0
    %161 = vmatpush2.msra.mxu0 0.0
    %162 = vmatprep.subr.mxu0 0.0
    %163 = vmatpush2.msra.mxu0 0.0
    %164 = vmatprep.subr.mxu0 0.0
    %165 = vmatpush2.msra.mxu0 0.0
    %166 = vmatprep.subr.mxu0 0.0
    %167 = vmatpush2.msra.mxu0 0.0
    %168 = vmatprep.subr.mxu0 0.0
    %169 = vmatpush2.msra.mxu0 0.0
    %170 = vmatprep.subr.mxu0 0.0
    %171 = vmatpush2.msra.mxu0 0.0
    %172 = vmatprep.subr.mxu0 0.0
    %173 = vmatpush2.msra.mxu0 0.0
    %174 = vmatprep.subr.mxu0 0.0
    %175 = vmatpush2.msra.mxu0 0.0
    %176 = vmatprep.subr.mxu0 0.0
    %177 = vmatpush2.msra.mxu0 0.0
    %178 = vmatprep.subr.mxu0 0.0
    %179 = vmatpush2.msra.mxu0 0.0
    %180 = vmatprep.subr.mxu0 0.0
    %181 = vmatpush2.msra.mxu0 0.0
    %182 = vmatprep.subr.mxu0 0.0
    %183 = vmatpush2.msra.mxu0 0.0
    %184 = vmatprep.subr.mxu0 0.0
    %185 = vmatpush2.msra.mxu0 0.0
    %186 = vmatprep.mubr.f32.mxu0 0.0
    %187 = vmatmul.mubr.f32.gmra.mxu0 %v113
    %v188 = vpop.f32.mrf.mxu0
    %v189 = vadd.f32 %v104, %v188
    %v190 = vpop.f32.mrf.mxu0
    %v191 = vadd.f32 %v108, %v190
    %192 = vdwg.mxu0
    %v193 = vmul.f32 %v189, 0.01
    %v194 = vmul.f32 %v191, 0.01
    %v195 = vmax.f32 %v189, %v193
    %v196 = vmax.f32 %v191, %v194
    %v197 = vld [vmem:[#allocation8] sm:$0xff]
    %v198 = vld [vmem:[#allocation8 + $0x8] sm:$0xff]
    %v199 = vld [vmem:[#allocation8 + $0x10] sm:$0xff]
    %v200 = vld [vmem:[#allocation8 + $0x18] sm:$0xff]
    %v201 = vld [vmem:[#allocation8 + $0x20] sm:$0xff]
    %v202 = vld [vmem:[#allocation8 + $0x28] sm:$0xff]
    %v203 = vld [vmem:[#allocation8 + $0x30] sm:$0xff]
    %v204 = vld [vmem:[#allocation8 + $0x38] sm:$0xff]
    %v205 = vld [vmem:[#allocation8 + $0x40] sm:$0xff]
    %v206 = vld [vmem:[#allocation8 + $0x48] sm:$0xff]
    %v207 = vld [vmem:[#allocation8 + $0x50] sm:$0xff]
    %v208 = vld [vmem:[#allocation8 + $0x58] sm:$0xff]
    %v209 = vld [vmem:[#allocation8 + $0x60] sm:$0xff]
    %v210 = vld [vmem:[#allocation8 + $0x68] sm:$0xff]
    %v211 = vld [vmem:[#allocation8 + $0x70] sm:$0xff]
    %v212 = vld [vmem:[#allocation8 + $0x78] sm:$0xff]
    %v213 = vld [vmem:[#allocation8 + $0x80] sm:$0xff]
    %v214 = vld [vmem:[#allocation8 + $0x88] sm:$0xff]
    %v215 = vld [vmem:[#allocation8 + $0x90] sm:$0xff]
    %v216 = vld [vmem:[#allocation8 + $0x98] sm:$0xff]
    %v217 = vld [vmem:[#allocation8 + $0xa0] sm:$0xff]
    %v218 = vld [vmem:[#allocation8 + $0xa8] sm:$0xff]
    %v219 = vld [vmem:[#allocation8 + $0xb0] sm:$0xff]
    %v220 = vld [vmem:[#allocation8 + $0xb8] sm:$0xff]
    %v221 = vld [vmem:[#allocation8 + $0xc0] sm:$0xff]
    %v222 = vld [vmem:[#allocation8 + $0xc8] sm:$0xff]
    %v223 = vld [vmem:[#allocation8 + $0xd0] sm:$0xff]
    %v224 = vld [vmem:[#allocation8 + $0xd8] sm:$0xff]
    %v225 = vld [vmem:[#allocation8 + $0xe0] sm:$0xff]
    %v226 = vld [vmem:[#allocation8 + $0xe8] sm:$0xff]
    %v227 = vld [vmem:[#allocation8 + $0xf0] sm:$0xff]
    %v228 = vld [vmem:[#allocation8 + $0xf8] sm:$0xff]
    %v229 = vld [vmem:[#allocation9] sm:$0xff]
    %v230 = vld [vmem:[#allocation9 + $0x8] sm:$0xff]
    %v231 = vld [vmem:[#allocation9 + $0x10] sm:$0xff]
    %v232 = vld [vmem:[#allocation9 + $0x18] sm:$0xff]
    %v233 = vld [vmem:[#allocation9 + $0x20] sm:$0xff]
    %v234 = vld [vmem:[#allocation9 + $0x28] sm:$0xff]
    %v235 = vld [vmem:[#allocation9 + $0x30] sm:$0xf]
    %v237 = vsel %vm115, %v235, 0
    %239 = vmatprep.subr.mxu0 0.0
    %240 = vmatpush1.msra.mxu0 0.0
    %241 = vmatprep.subr.mxu0 0.0
    %242 = vmatpush1.msra.mxu0 0.0
    %243 = vmatprep.subr.mxu0 0.0
    %244 = vmatpush1.msra.mxu0 0.0
    %245 = vmatprep.subr.mxu0 0.0
    %246 = vmatpush1.msra.mxu0 0.0
    %247 = vmatprep.subr.mxu0 0.0
    %248 = vmatpush1.msra.mxu0 0.0
    %249 = vmatprep.subr.mxu0 0.0
    %250 = vmatpush1.msra.mxu0 0.0
    %251 = vmatprep.subr.mxu0 0.0
    %252 = vmatpush1.msra.mxu0 0.0
    %253 = vmatprep.subr.mxu0 0.0
    %254 = vmatpush1.msra.mxu0 0.0
    %255 = vmatprep.subr.mxu0 0.0
    %256 = vmatpush1.msra.mxu0 0.0
    %257 = vmatprep.subr.mxu0 0.0
    %258 = vmatpush1.msra.mxu0 %v237
    %259 = vmatprep.subr.mxu0 0.0
    %260 = vmatpush1.msra.mxu0 %v234
    %261 = vmatprep.subr.mxu0 0.0
    %262 = vmatpush1.msra.mxu0 %v233
    %263 = vmatprep.subr.mxu0 0.0
    %264 = vmatpush1.msra.mxu0 %v232
    %265 = vmatprep.subr.mxu0 0.0
    %266 = vmatpush1.msra.mxu0 %v231
    %267 = vmatprep.subr.mxu0 0.0
    %268 = vmatpush1.msra.mxu0 %v230
    %269 = vmatprep.subr.mxu0 0.0
    %270 = vmatpush1.msra.mxu0 %v229
    %271 = vmatprep.subr.mxu0 0.0
    %272 = vmatpush2.msra.mxu0 0.0
    %273 = vmatprep.subr.mxu0 0.0
    %274 = vmatpush2.msra.mxu0 0.0
    %275 = vmatprep.subr.mxu0 0.0
    %276 = vmatpush2.msra.mxu0 0.0
    %277 = vmatprep.subr.mxu0 0.0
    %278 = vmatpush2.msra.mxu0 0.0
    %279 = vmatprep.subr.mxu0 0.0
    %280 = vmatpush2.msra.mxu0 0.0
    %281 = vmatprep.subr.mxu0 0.0
    %282 = vmatpush2.msra.mxu0 0.0
    %283 = vmatprep.subr.mxu0 0.0
    %284 = vmatpush2.msra.mxu0 0.0
    %285 = vmatprep.subr.mxu0 0.0
    %286 = vmatpush2.msra.mxu0 0.0
    %287 = vmatprep.subr.mxu0 0.0
    %288 = vmatpush2.msra.mxu0 0.0
    %289 = vmatprep.subr.mxu0 0.0
    %290 = vmatpush2.msra.mxu0 0.0
    %291 = vmatprep.subr.mxu0 0.0
    %292 = vmatpush2.msra.mxu0 0.0
    %293 = vmatprep.subr.mxu0 0.0
    %294 = vmatpush2.msra.mxu0 0.0
    %295 = vmatprep.subr.mxu0 0.0
    %296 = vmatpush2.msra.mxu0 0.0
    %297 = vmatprep.subr.mxu0 0.0
    %298 = vmatpush2.msra.mxu0 0.0
    %299 = vmatprep.subr.mxu0 0.0
    %300 = vmatpush2.msra.mxu0 0.0
    %301 = vmatprep.subr.mxu0 0.0
    %302 = vmatpush2.msra.mxu0 0.0
    %303 = vmatprep.mubr.f32.mxu0 0.0
    %304 = vmatmul.mubr.f32.gmra.mxu0 %v113
    %v305 = vpop.f32.mrf.mxu0
    %v306 = vadd.f32 0.0, %v305
    %v307 = vpop.f32.mrf.mxu0
    %308 = vdwg.mxu0
    %309 = vmatprep.subr.mxu0 0.0
    %310 = vmatpush1.msra.mxu0 %v212
    %311 = vmatprep.subr.mxu0 0.0
    %312 = vmatpush1.msra.mxu0 %v211
    %313 = vmatprep.subr.mxu0 0.0
    %314 = vmatpush1.msra.mxu0 %v210
    %315 = vmatprep.subr.mxu0 0.0
    %316 = vmatpush1.msra.mxu0 %v209
    %317 = vmatprep.subr.mxu0 0.0
    %318 = vmatpush1.msra.mxu0 %v208
    %319 = vmatprep.subr.mxu0 0.0
    %320 = vmatpush1.msra.mxu0 %v207
    %321 = vmatprep.subr.mxu0 0.0
    %322 = vmatpush1.msra.mxu0 %v206
    %323 = vmatprep.subr.mxu0 0.0
    %324 = vmatpush1.msra.mxu0 %v205
    %325 = vmatprep.subr.mxu0 0.0
    %326 = vmatpush1.msra.mxu0 %v204
    %327 = vmatprep.subr.mxu0 0.0
    %328 = vmatpush1.msra.mxu0 %v203
    %329 = vmatprep.subr.mxu0 0.0
    %330 = vmatpush1.msra.mxu0 %v202
    %331 = vmatprep.subr.mxu0 0.0
    %332 = vmatpush1.msra.mxu0 %v201
    %333 = vmatprep.subr.mxu0 0.0
    %334 = vmatpush1.msra.mxu0 %v200
    %335 = vmatprep.subr.mxu0 0.0
    %336 = vmatpush1.msra.mxu0 %v199
    %337 = vmatprep.subr.mxu0 0.0
    %338 = vmatpush1.msra.mxu0 %v198
    %339 = vmatprep.subr.mxu0 0.0
    %340 = vmatpush1.msra.mxu0 %v197
    %341 = vmatprep.subr.mxu0 0.0
    %342 = vmatpush2.msra.mxu0 %v228
    %343 = vmatprep.subr.mxu0 0.0
    %344 = vmatpush2.msra.mxu0 %v227
    %345 = vmatprep.subr.mxu0 0.0
    %346 = vmatpush2.msra.mxu0 %v226
    %347 = vmatprep.subr.mxu0 0.0
    %348 = vmatpush2.msra.mxu0 %v225
    %349 = vmatprep.subr.mxu0 0.0
    %350 = vmatpush2.msra.mxu0 %v224
    %351 = vmatprep.subr.mxu0 0.0
    %352 = vmatpush2.msra.mxu0 %v223
    %353 = vmatprep.subr.mxu0 0.0
    %354 = vmatpush2.msra.mxu0 %v222
    %355 = vmatprep.subr.mxu0 0.0
    %356 = vmatpush2.msra.mxu0 %v221
    %357 = vmatprep.subr.mxu0 0.0
    %358 = vmatpush2.msra.mxu0 %v220
    %359 = vmatprep.subr.mxu0 0.0
    %360 = vmatpush2.msra.mxu0 %v219
    %361 = vmatprep.subr.mxu0 0.0
    %362 = vmatpush2.msra.mxu0 %v218
    %363 = vmatprep.subr.mxu0 0.0
    %364 = vmatpush2.msra.mxu0 %v217
    %365 = vmatprep.subr.mxu0 0.0
    %366 = vmatpush2.msra.mxu0 %v216
    %367 = vmatprep.subr.mxu0 0.0
    %368 = vmatpush2.msra.mxu0 %v215
    %369 = vmatprep.subr.mxu0 0.0
    %370 = vmatpush2.msra.mxu0 %v214
    %371 = vmatprep.subr.mxu0 0.0
    %372 = vmatpush2.msra.mxu0 %v213
    %373 = vmatprep.mubr.f32.mxu0 %v196
    %374 = vmatmul.mubr.f32.gmra.mxu0 %v195
    %v375 = vpop.f32.mrf.mxu0
    %v376 = vadd.f32 %v306, %v375
    %v377 = vpop.f32.mrf.mxu0
    %378 = vdwg.mxu0
    %v379 = vld [vmem:[%s5] sm:$0x1]
    %v381 = vlaneseq
    %v382 = vshrl.u32 %v381, 7
    %v383 = vsub.s32 0, %v382
    %v384 = vrot.slane %v379, %v383
    %v386 = vadd.f32 %v376, %v384
    %v387 = vmul.f32 %v386, 0.01
    %v388 = vmax.f32 %v386, %v387
    %v389 = vld [vmem:[%s6] sm:$0x1]
    %s390 = sld [smem:[#allocation2]]
    %v391 = vstv %s390
    %392 = vmatprep.subr.mxu0 0.0
    %393 = vmatpush1.xpose.msra.mxu0 0.0
    %394 = vmatprep.subr.mxu0 0.0
    %395 = vmatpush1.xpose.msra.mxu0 0.0
    %396 = vmatprep.subr.mxu0 0.0
    %397 = vmatpush1.xpose.msra.mxu0 0.0
    %398 = vmatprep.subr.mxu0 0.0
    %399 = vmatpush1.xpose.msra.mxu0 0.0
    %400 = vmatprep.subr.mxu0 0.0
    %401 = vmatpush1.xpose.msra.mxu0 0.0
    %402 = vmatprep.subr.mxu0 0.0
    %403 = vmatpush1.xpose.msra.mxu0 0.0
    %404 = vmatprep.subr.mxu0 0.0
    %405 = vmatpush1.xpose.msra.mxu0 0.0
    %406 = vmatprep.subr.mxu0 0.0
    %407 = vmatpush1.xpose.msra.mxu0 0.0
    %408 = vmatprep.subr.mxu0 0.0
    %409 = vmatpush1.xpose.msra.mxu0 0.0
    %410 = vmatprep.subr.mxu0 0.0
    %411 = vmatpush1.xpose.msra.mxu0 0.0
    %412 = vmatprep.subr.mxu0 0.0
    %413 = vmatpush1.xpose.msra.mxu0 0.0
    %414 = vmatprep.subr.mxu0 0.0
    %415 = vmatpush1.xpose.msra.mxu0 0.0
    %416 = vmatprep.subr.mxu0 0.0
    %417 = vmatpush1.xpose.msra.mxu0 0.0
    %418 = vmatprep.subr.mxu0 0.0
    %419 = vmatpush1.xpose.msra.mxu0 0.0
    %420 = vmatprep.subr.mxu0 0.0
    %421 = vmatpush1.xpose.msra.mxu0 0.0
    %422 = vmatprep.subr.mxu0 0.0
    %423 = vmatpush1.xpose.msra.mxu0 %v388
    %424 = vmatprep.subr.mxu0 0.0
    %425 = vmatpush2.xpose.msra.mxu0 0.0
    %426 = vmatprep.subr.mxu0 0.0
    %427 = vmatpush2.xpose.msra.mxu0 0.0
    %428 = vmatprep.subr.mxu0 0.0
    %429 = vmatpush2.xpose.msra.mxu0 0.0
    %430 = vmatprep.subr.mxu0 0.0
    %431 = vmatpush2.xpose.msra.mxu0 0.0
    %432 = vmatprep.subr.mxu0 0.0
    %433 = vmatpush2.xpose.msra.mxu0 0.0
    %434 = vmatprep.subr.mxu0 0.0
    %435 = vmatpush2.xpose.msra.mxu0 0.0
    %436 = vmatprep.subr.mxu0 0.0
    %437 = vmatpush2.xpose.msra.mxu0 0.0
    %438 = vmatprep.subr.mxu0 0.0
    %439 = vmatpush2.xpose.msra.mxu0 0.0
    %440 = vmatprep.subr.mxu0 0.0
    %441 = vmatpush2.xpose.msra.mxu0 0.0
    %442 = vmatprep.subr.mxu0 0.0
    %443 = vmatpush2.xpose.msra.mxu0 0.0
    %444 = vmatprep.subr.mxu0 0.0
    %445 = vmatpush2.xpose.msra.mxu0 0.0
    %446 = vmatprep.subr.mxu0 0.0
    %447 = vmatpush2.xpose.msra.mxu0 0.0
    %448 = vmatprep.subr.mxu0 0.0
    %449 = vmatpush2.xpose.msra.mxu0 0.0
    %450 = vmatprep.subr.mxu0 0.0
    %451 = vmatpush2.xpose.msra.mxu0 0.0
    %452 = vmatprep.subr.mxu0 0.0
    %453 = vmatpush2.xpose.msra.mxu0 0.0
    %454 = vmatprep.subr.mxu0 0.0
    %455 = vmatpush2.xpose.msra.mxu0 0.0
    %456 = vmatprep.mubr.f32.mxu0 0.0
    %457 = vmatmul.mubr.f32.gmra.mxu0 %v389
    %v458 = vpop.f32.mrf.mxu0
    %v459 = vadd.f32 %v391, %v458
    %v460 = vpop.f32.mrf.mxu0
    %461 = vdwg.mxu0
    %vm462 = vcmask 57344
    %463 = vst.msk [vmem:[#allocation11] sm:$0x1] %vm462, %v459
    // Predicated region
    $region50: #{tpu_custom_call.1} parent=1 // pred_check
      _
    $region51: #{tpu_custom_call.1} parent=1 // pred_check_branch
      %465 = sbr.rel (0) target = $region53
    $region52: #{tpu_custom_call.1} parent=1 // pred_region
      %s467 = ssub.s32 16, 16
      %468 = vsyncadd [#allocation5], %s467
      %s470 = sshll.u32 [#allocation11], 4
      %s471 = int_to_ptr.vmem [resolvable:$true] %s470
      %473 = dma.vmem_to_hbm [thread:$0]  %s471, 16, %s8, [#allocation5]
    $region53: #{tpu_custom_call.1} parent=1 // pred_fallthru
      _
    // Predicated region
    $region54: #{tpu_custom_call.1} parent=1 // pred_check
      _
    $region55: #{tpu_custom_call.1} parent=1 // pred_check_branch
      %475 = sbr.rel (0) target = $region57
    $region56: #{tpu_custom_call.1} parent=1 // pred_region
      %476 = dma.done [#allocation5], 16
    $region57: #{tpu_custom_call.1} parent=1 // pred_fallthru
      _
    %477 = vsyncpa [#allocation4], 1
    %478 = vsyncpa [#allocation7], 1
    %479 = vsyncpa [#allocation10], 1
    %480 = vsyncpa [#allocation5], 1

</llo_original>
